<compile_context>
chip_gen: v6e
topology: v6e:2x2x1
jax: 0.10.0
libtpu: 0.0.40
codegen_flags: <defaults>
</compile_context>

<pallas_src>
import jax
import jax.numpy as jnp
from jax.experimental import pallas as pl
from jax.experimental.pallas import tpu as pltpu


def film_fusion_kernel(img_ref, txt_ref, w1_ref, b1_ref,
                       w2g_ref, b2g_ref, w2b_ref, b2b_ref,
                       lnw_ref, lnb_ref, out_ref):
    img = img_ref[...].astype(jnp.float32)            # (TB, D)
    txt = txt_ref[...].astype(jnp.float32)            # (TB, D)

    # --- film_generator: Linear(D, 2D) -> ReLU -> Linear(2D, 2D) ---
    # MXU path in bf16 (weights shipped as bf16), accumulate in f32.
    txt_bf = txt.astype(jnp.bfloat16)
    h = jnp.dot(txt_bf, w1_ref[...], preferred_element_type=jnp.float32)
    h = jnp.maximum(h + b1_ref[...], 0.0)
    h_bf = h.astype(jnp.bfloat16)
    # Second linear split into gamma / beta halves (== torch.chunk(film, 2, 1)).
    gamma = jnp.dot(h_bf, w2g_ref[...],
                    preferred_element_type=jnp.float32) + b2g_ref[...]
    beta = jnp.dot(h_bf, w2b_ref[...],
                   preferred_element_type=jnp.float32) + b2b_ref[...]

    # --- LayerNorm(image_features), eps=1e-5, biased variance (f32) ---
    mean = jnp.mean(img, axis=-1, keepdims=True)
    xc = img - mean
    var = jnp.mean(xc * xc, axis=-1, keepdims=True)
    ln = xc * jax.lax.rsqrt(var + 1e-5) * lnw_ref[...] + lnb_ref[...]

    # --- FiLM modulation + residual, fused tail: ln*(1+gamma) + (beta + txt) ---
    out_ref[...] = (ln * (1.0 + gamma) + (beta + txt)).astype(out_ref.dtype)


def film_fusion(image_features, text_features, params):
    B, dim = image_features.shape
    assert dim % 128 == 0, "feature dim must be a multiple of 128 (lane width)"
    w1, b1, w2, b2, lnw, lnb = params

    # bf16 weights for the MXU; split W2/b2 into gamma / beta halves.
    w1_bf = w1.astype(jnp.bfloat16)                       # (D, 2D)
    w2g = w2[:, :dim].astype(jnp.bfloat16)                # (2D, D)
    w2b = w2[:, dim:].astype(jnp.bfloat16)                # (2D, D)
    b1r = b1.reshape(1, -1).astype(jnp.float32)           # (1, 2D)
    b2g = b2[:dim].reshape(1, -1).astype(jnp.float32)     # (1, D)
    b2b = b2[dim:].reshape(1, -1).astype(jnp.float32)     # (1, D)
    lnw_r = lnw.reshape(1, -1).astype(jnp.float32)        # (1, D)
    lnb_r = lnb.reshape(1, -1).astype(jnp.float32)        # (1, D)

    # Batch tile: 256 rows feeds the 2x256 MXU on v6e/v7x (128 also fine on
    # v5e); tiny batches collapse to a single sublane-aligned block.
    if B >= 256:
        tb = 256
    elif B >= 128:
        tb = 128
    else:
        tb = pl.cdiv(B, 8) * 8
    b_pad = pl.cdiv(B, tb) * tb

    img, txt = image_features, text_features
    if b_pad != B:
        pad = ((0, b_pad - B), (0, 0))
        img = jnp.pad(img, pad)
        txt = jnp.pad(txt, pad)

    grid = (b_pad // tb,)

    act_spec = pl.BlockSpec((tb, dim), lambda i: (i, 0))
    # Weights/params: one block = whole array, constant index_map -> DMA'd once
    # and kept VMEM-resident across all grid iterations.
    const = lambda i: (0, 0)
    full_spec = lambda a: pl.BlockSpec(a.shape, const)

    # TODO(synk): for very large dim (>=2048) on v7x, add a K-reduction grid
    # axis and stream w1/w2 tiles instead of holding them fully resident.

    flops = 2 * b_pad * dim * (2 * dim) + 2 * (2 * b_pad * (2 * dim) * dim)
    bytes_accessed = (
        (w1_bf.size + w2g.size + w2b.size) * 2
        + (b1r.size + b2g.size + b2b.size + lnw_r.size + lnb_r.size) * 4
        + 3 * b_pad * dim * image_features.dtype.itemsize
    )

    out = pl.pallas_call(
        film_fusion_kernel,
        out_shape=jax.ShapeDtypeStruct((b_pad, dim), image_features.dtype),
        grid=grid,
        in_specs=[
            act_spec, act_spec,
            full_spec(w1_bf), full_spec(b1r),
            full_spec(w2g), full_spec(b2g),
            full_spec(w2b), full_spec(b2b),
            full_spec(lnw_r), full_spec(lnb_r),
        ],
        out_specs=act_spec,
        compiler_params=pltpu.CompilerParams(
            dimension_semantics=("parallel",),
            vmem_limit_bytes=64 * 1024 * 1024,
        ),
        cost_estimate=pl.CostEstimate(
            flops=flops, transcendentals=0, bytes_accessed=bytes_accessed),
    )(img, txt, w1_bf, b1r, w2g, b2g, w2b, b2b, lnw_r, lnb_r)

    return out[:B] if b_pad != B else out


def film_fusion_ref(image_features, text_features, params):
    """Pure-JAX f32 reference mirroring the PyTorch forward."""
    w1, b1, w2, b2, lnw, lnb = params
    h = jnp.maximum(text_features @ w1 + b1, 0.0)
    film = h @ w2 + b2
    dim = image_features.shape[-1]
    gamma, beta = film[:, :dim], film[:, dim:]
    mean = jnp.mean(image_features, axis=-1, keepdims=True)
    xc = image_features - mean
    var = jnp.mean(xc * xc, axis=-1, keepdims=True)
    ln = xc * jax.lax.rsqrt(var + 1e-5) * lnw + lnb
    return ln * (1.0 + gamma) + beta + text_features


def init_params(key, dim):
    k1, k2, k3, k4 = jax.random.split(key, 4)
    w1 = jax.random.normal(k1, (dim, 2 * dim), jnp.float32) * 0.02
    b1 = jax.random.normal(k2, (2 * dim,), jnp.float32) * 0.02
    w2 = jax.random.normal(k3, (2 * dim, 2 * dim), jnp.float32) * 0.02
    b2 = jax.random.normal(k4, (2 * dim,), jnp.float32) * 0.02
    lnw = jnp.ones((dim,), jnp.float32)    # nn.LayerNorm default init
    lnb = jnp.zeros((dim,), jnp.float32)
    return (w1, b1, w2, b2, lnw, lnb)


if __name__ == "__main__":
    key = jax.random.PRNGKey(0)
    k_img, k_txt, k_params, k_img2, k_txt2 = jax.random.split(key, 5)

    # Small shapes; feature axis a multiple of 128 (lane width).
    B, dim = 8, 128
    image_features = jax.random.normal(k_img, (B, dim), jnp.float32)
    text_features = jax.random.normal(k_txt, (B, dim), jnp.float32)
    params = init_params(k_params, dim)

    out = jax.block_until_ready(film_fusion(image_features, text_features, params))
    ref = film_fusion_ref(image_features, text_features, params)
    assert out.shape == (B, dim)
    # bf16 matmuls (f32 accumulation) vs. the f32 reference -> loose tolerance.
    assert jnp.allclose(out, ref, atol=1e-2, rtol=1e-2), "mismatch vs reference"

    # Second case exercising the batch-padding path (B not a multiple of 8).
    B2 = 5
    img2 = jax.random.normal(k_img2, (B2, dim), jnp.float32)
    txt2 = jax.random.normal(k_txt2, (B2, dim), jnp.float32)
    out2 = jax.block_until_ready(film_fusion(img2, txt2, params))
    ref2 = film_fusion_ref(img2, txt2, params)
    assert out2.shape == (B2, dim)
    assert jnp.allclose(out2, ref2, atol=1e-2, rtol=1e-2), "mismatch vs reference (padded)"

    print("KERNEL_OK")
</pallas_src>

<mosaic_0001>
module attributes {stable_mosaic.version = 11 : i64} {
  func.func @film_fusion_kernel(%arg0: i32, %arg1: memref<8x128xf32, #tpu.memory_space<vmem>>, %arg2: memref<8x128xf32, #tpu.memory_space<vmem>>, %arg3: memref<128x256xbf16, #tpu.memory_space<vmem>>, %arg4: memref<1x256xf32, #tpu.memory_space<vmem>>, %arg5: memref<256x128xbf16, #tpu.memory_space<vmem>>, %arg6: memref<1x128xf32, #tpu.memory_space<vmem>>, %arg7: memref<256x128xbf16, #tpu.memory_space<vmem>>, %arg8: memref<1x128xf32, #tpu.memory_space<vmem>>, %arg9: memref<1x128xf32, #tpu.memory_space<vmem>>, %arg10: memref<1x128xf32, #tpu.memory_space<vmem>>, %arg11: memref<8x128xf32, #tpu.memory_space<vmem>>) attributes {dimension_semantics = [#tpu.dimension_semantics<parallel>], iteration_bounds = array<i64: 1>, scalar_prefetch = 0 : i64, scratch_operands = 0 : i64, tpu.core_type = #tpu.core_type<tc>, window_params = [{transform_indices = @transform_0, window_bounds = array<i64: 8, 128>}, {transform_indices = @transform_1, window_bounds = array<i64: 8, 128>}, {pipeline_mode = #tpu.pipeline_mode<synchronous>, transform_indices = @transform_2, window_bounds = array<i64: 128, 256>}, {pipeline_mode = #tpu.pipeline_mode<synchronous>, transform_indices = @transform_3, window_bounds = array<i64: 1, 256>}, {pipeline_mode = #tpu.pipeline_mode<synchronous>, transform_indices = @transform_4, window_bounds = array<i64: 256, 128>}, {pipeline_mode = #tpu.pipeline_mode<synchronous>, transform_indices = @transform_5, window_bounds = array<i64: 1, 128>}, {pipeline_mode = #tpu.pipeline_mode<synchronous>, transform_indices = @transform_6, window_bounds = array<i64: 256, 128>}, {pipeline_mode = #tpu.pipeline_mode<synchronous>, transform_indices = @transform_7, window_bounds = array<i64: 1, 128>}, {pipeline_mode = #tpu.pipeline_mode<synchronous>, transform_indices = @transform_8, window_bounds = array<i64: 1, 128>}, {pipeline_mode = #tpu.pipeline_mode<synchronous>, transform_indices = @transform_9, window_bounds = array<i64: 1, 128>}, {transform_indices = @transform_10, window_bounds = array<i64: 8, 128>}]} {
    %c0 = arith.constant 0 : index
    %c0_0 = arith.constant 0 : index
    %0 = vector.load %arg1[%c0, %c0_0] : memref<8x128xf32, #tpu.memory_space<vmem>>, vector<8x128xf32>
    %c0_1 = arith.constant 0 : index
    %c0_2 = arith.constant 0 : index
    %1 = vector.load %arg2[%c0_1, %c0_2] : memref<8x128xf32, #tpu.memory_space<vmem>>, vector<8x128xf32>
    %2 = arith.truncf %1 : vector<8x128xf32> to vector<8x128xbf16>
    %c0_3 = arith.constant 0 : index
    %c0_4 = arith.constant 0 : index
    %3 = vector.load %arg3[%c0_3, %c0_4] : memref<128x256xbf16, #tpu.memory_space<vmem>>, vector<128x256xbf16>
    %cst = arith.constant dense<0.000000e+00> : vector<8x256xf32>
    %4 = tpu.matmul %2, %3, %cst {dimension_numbers = #tpu.dot_dimension_numbers<[1], [0], [0], [1], [0, 0, 1, 1], [], []>} : vector<8x128xbf16>, vector<128x256xbf16>, vector<8x256xf32> -> vector<8x256xf32>
    %c0_5 = arith.constant 0 : index
    %c0_6 = arith.constant 0 : index
    %5 = vector.load %arg4[%c0_5, %c0_6] : memref<1x256xf32, #tpu.memory_space<vmem>>, vector<1x256xf32>
    %6 = vector.broadcast %5 : vector<1x256xf32> to vector<8x256xf32>
    %7 = arith.addf %4, %6 : vector<8x256xf32>
    %cst_7 = arith.constant 0.000000e+00 : f32
    %8 = vector.broadcast %cst_7 : f32 to vector<8x256xf32>
    %9 = arith.maximumf %7, %8 : vector<8x256xf32>
    %10 = arith.truncf %9 : vector<8x256xf32> to vector<8x256xbf16>
    %c0_8 = arith.constant 0 : index
    %c0_9 = arith.constant 0 : index
    %11 = vector.load %arg5[%c0_8, %c0_9] : memref<256x128xbf16, #tpu.memory_space<vmem>>, vector<256x128xbf16>
    %cst_10 = arith.constant dense<0.000000e+00> : vector<8x128xf32>
    %12 = tpu.matmul %10, %11, %cst_10 {dimension_numbers = #tpu.dot_dimension_numbers<[1], [0], [0], [1], [0, 0, 1, 1], [], []>} : vector<8x256xbf16>, vector<256x128xbf16>, vector<8x128xf32> -> vector<8x128xf32>
    %c0_11 = arith.constant 0 : index
    %c0_12 = arith.constant 0 : index
    %13 = vector.load %arg6[%c0_11, %c0_12] : memref<1x128xf32, #tpu.memory_space<vmem>>, vector<1x128xf32>
    %14 = vector.broadcast %13 : vector<1x128xf32> to vector<8x128xf32>
    %15 = arith.addf %12, %14 : vector<8x128xf32>
    %c0_13 = arith.constant 0 : index
    %c0_14 = arith.constant 0 : index
    %16 = vector.load %arg7[%c0_13, %c0_14] : memref<256x128xbf16, #tpu.memory_space<vmem>>, vector<256x128xbf16>
    %cst_15 = arith.constant dense<0.000000e+00> : vector<8x128xf32>
    %17 = tpu.matmul %10, %16, %cst_15 {dimension_numbers = #tpu.dot_dimension_numbers<[1], [0], [0], [1], [0, 0, 1, 1], [], []>} : vector<8x256xbf16>, vector<256x128xbf16>, vector<8x128xf32> -> vector<8x128xf32>
    %c0_16 = arith.constant 0 : index
    %c0_17 = arith.constant 0 : index
    %18 = vector.load %arg8[%c0_16, %c0_17] : memref<1x128xf32, #tpu.memory_space<vmem>>, vector<1x128xf32>
    %19 = vector.broadcast %18 : vector<1x128xf32> to vector<8x128xf32>
    %20 = arith.addf %17, %19 : vector<8x128xf32>
    %cst_18 = arith.constant dense<0.000000e+00> : vector<8xf32>
    %21 = vector.multi_reduction <add>, %0, %cst_18 [1] : vector<8x128xf32> to vector<8xf32>
    %22 = vector.shape_cast %21 : vector<8xf32> to vector<8x1xf32>
    %cst_19 = arith.constant 1.280000e+02 : f32
    %23 = vector.broadcast %cst_19 : f32 to vector<8x1xf32>
    %24 = arith.divf %22, %23 : vector<8x1xf32>
    %25 = vector.broadcast %24 : vector<8x1xf32> to vector<8x128xf32>
    %26 = arith.subf %0, %25 : vector<8x128xf32>
    %27 = arith.mulf %26, %26 : vector<8x128xf32>
    %cst_20 = arith.constant dense<0.000000e+00> : vector<8xf32>
    %28 = vector.multi_reduction <add>, %27, %cst_20 [1] : vector<8x128xf32> to vector<8xf32>
    %29 = vector.shape_cast %28 : vector<8xf32> to vector<8x1xf32>
    %cst_21 = arith.constant 1.280000e+02 : f32
    %30 = vector.broadcast %cst_21 : f32 to vector<8x1xf32>
    %31 = arith.divf %29, %30 : vector<8x1xf32>
    %cst_22 = arith.constant 9.99999974E-6 : f32
    %32 = vector.broadcast %cst_22 : f32 to vector<8x1xf32>
    %33 = arith.addf %31, %32 : vector<8x1xf32>
    %34 = math.rsqrt %33 : vector<8x1xf32>
    %35 = vector.broadcast %34 : vector<8x1xf32> to vector<8x128xf32>
    %36 = arith.mulf %26, %35 : vector<8x128xf32>
    %c0_23 = arith.constant 0 : index
    %c0_24 = arith.constant 0 : index
    %37 = vector.load %arg9[%c0_23, %c0_24] : memref<1x128xf32, #tpu.memory_space<vmem>>, vector<1x128xf32>
    %38 = vector.broadcast %37 : vector<1x128xf32> to vector<8x128xf32>
    %39 = arith.mulf %36, %38 : vector<8x128xf32>
    %c0_25 = arith.constant 0 : index
    %c0_26 = arith.constant 0 : index
    %40 = vector.load %arg10[%c0_25, %c0_26] : memref<1x128xf32, #tpu.memory_space<vmem>>, vector<1x128xf32>
    %41 = vector.broadcast %40 : vector<1x128xf32> to vector<8x128xf32>
    %42 = arith.addf %39, %41 : vector<8x128xf32>
    %cst_27 = arith.constant 1.000000e+00 : f32
    %43 = vector.broadcast %cst_27 : f32 to vector<8x128xf32>
    %44 = arith.addf %43, %15 : vector<8x128xf32>
    %45 = arith.mulf %42, %44 : vector<8x128xf32>
    %46 = arith.addf %20, %1 : vector<8x128xf32>
    %47 = arith.addf %45, %46 : vector<8x128xf32>
    %c0_28 = arith.constant 0 : index
    %c0_29 = arith.constant 0 : index
    %48 = vector.load %arg11[%c0_28, %c0_29] : memref<8x128xf32, #tpu.memory_space<vmem>>, vector<8x128xf32>
    tpu.vector_store %arg11[%c0_28, %c0_29], %47 {strides = array<i32>} : memref<8x128xf32, #tpu.memory_space<vmem>>, vector<8x128xf32>,
    return
  }
  func.func @transform_0(%arg0: i32) -> (i32, i32) {
    %c0_i32 = arith.constant 0 : i32
    %c0_i32_0 = arith.constant 0 : i32
    return %arg0, %c0_i32 : i32, i32
  }
  func.func @transform_1(%arg0: i32) -> (i32, i32) {
    %c0_i32 = arith.constant 0 : i32
    %c0_i32_0 = arith.constant 0 : i32
    return %arg0, %c0_i32 : i32, i32
  }
  func.func @transform_2(%arg0: i32) -> (i32, i32) {
    %c0_i32 = arith.constant 0 : i32
    %c0_i32_0 = arith.constant 0 : i32
    %c0_i32_1 = arith.constant 0 : i32
    return %c0_i32, %c0_i32_0 : i32, i32
  }
  func.func @transform_3(%arg0: i32) -> (i32, i32) {
    %c0_i32 = arith.constant 0 : i32
    %c0_i32_0 = arith.constant 0 : i32
    %c0_i32_1 = arith.constant 0 : i32
    return %c0_i32, %c0_i32_0 : i32, i32
  }
  func.func @transform_4(%arg0: i32) -> (i32, i32) {
    %c0_i32 = arith.constant 0 : i32
    %c0_i32_0 = arith.constant 0 : i32
    %c0_i32_1 = arith.constant 0 : i32
    return %c0_i32, %c0_i32_0 : i32, i32
  }
  func.func @transform_5(%arg0: i32) -> (i32, i32) {
    %c0_i32 = arith.constant 0 : i32
    %c0_i32_0 = arith.constant 0 : i32
    %c0_i32_1 = arith.constant 0 : i32
    return %c0_i32, %c0_i32_0 : i32, i32
  }
  func.func @transform_6(%arg0: i32) -> (i32, i32) {
    %c0_i32 = arith.constant 0 : i32
    %c0_i32_0 = arith.constant 0 : i32
    %c0_i32_1 = arith.constant 0 : i32
    return %c0_i32, %c0_i32_0 : i32, i32
  }
  func.func @transform_7(%arg0: i32) -> (i32, i32) {
    %c0_i32 = arith.constant 0 : i32
    %c0_i32_0 = arith.constant 0 : i32
    %c0_i32_1 = arith.constant 0 : i32
    return %c0_i32, %c0_i32_0 : i32, i32
  }
  func.func @transform_8(%arg0: i32) -> (i32, i32) {
    %c0_i32 = arith.constant 0 : i32
    %c0_i32_0 = arith.constant 0 : i32
    %c0_i32_1 = arith.constant 0 : i32
    return %c0_i32, %c0_i32_0 : i32, i32
  }
  func.func @transform_9(%arg0: i32) -> (i32, i32) {
    %c0_i32 = arith.constant 0 : i32
    %c0_i32_0 = arith.constant 0 : i32
    %c0_i32_1 = arith.constant 0 : i32
    return %c0_i32, %c0_i32_0 : i32, i32
  }
  func.func @transform_10(%arg0: i32) -> (i32, i32) {
    %c0_i32 = arith.constant 0 : i32
    %c0_i32_0 = arith.constant 0 : i32
    return %arg0, %c0_i32 : i32, i32
  }
}

</mosaic_0001>

<llo_original>
// kernel: tpu_custom_call.1
$region0: #{tpu_custom_call.1}
  #allocation0 [shape = 'u32[]', space=smem, size = 0x4, offset = 0x4, fixed_abs, tag = 'smem constant byte address 0x4 - core index']
  #allocation1 [shape = 'u32[144,128]{1,0:T(1,128)}', space=vmem, size = 0x12000, scoped, tag = 'internal scratch']
  %s0 = inlined_call_operand.hbm [shape: f32[8,128], index: 0, kind: input, shape index: {}]
  %s1 = inlined_call_operand.hbm [shape: f32[8,128], index: 1, kind: input, shape index: {}]
  %s2 = inlined_call_operand.hbm [shape: bf16[128,256], index: 2, kind: input, shape index: {}]
  %s3 = inlined_call_operand.vmem [shape: f32[1,256], index: 3, kind: input, shape index: {}]
  %s4 = inlined_call_operand.hbm [shape: bf16[256,128], index: 4, kind: input, shape index: {}]
  %s5 = inlined_call_operand.vmem [shape: f32[1,128], index: 5, kind: input, shape index: {}]
  %s6 = inlined_call_operand.hbm [shape: bf16[256,128], index: 6, kind: input, shape index: {}]
  %s7 = inlined_call_operand.vmem [shape: f32[1,128], index: 7, kind: input, shape index: {}]
  %s8 = inlined_call_operand.vmem [shape: f32[1,128], index: 8, kind: input, shape index: {}]
  %s9 = inlined_call_operand.vmem [shape: f32[1,128], index: 9, kind: input, shape index: {}]
  %s10 = inlined_call_operand.hbm [shape: f32[8,128], index: 10, kind: output, shape index: {}]
  %s11 = sld [smem:[#allocation0]]
  $region70: #{tpu_custom_call.1} parent=0
    _
  %s13 = ssub.s32 1, %s11
  %s14 = scalar_select 0, %s13, %s11
  $region1: #{tpu_custom_call.1} parent=0
    #allocation2 [shape = 'u8[4096]{0}', space=vmem, size = 0x1000, scoped, tag = 'input window, operand 0, single buffered']
    #allocation3 [shape = 's32[1]{0}', space=sflag, size = 0x4, scoped, tag = 'scoped memory for tpu_custom_call.1']
    #allocation4 [shape = 's32[1]{0}', space=sflag, size = 0x4, scoped, tag = 'scoped memory for tpu_custom_call.1']
    #allocation5 [shape = 'u8[4096]{0}', space=vmem, size = 0x1000, scoped, tag = 'input window, operand 1, single buffered']
    #allocation6 [shape = 's32[1]{0}', space=sflag, size = 0x4, scoped, tag = 'scoped memory for tpu_custom_call.1']
    #allocation7 [shape = 'u8[65536]{0}', space=vmem, size = 0x10000, scoped, tag = 'input window, operand 2, single buffered']
    #allocation8 [shape = 'u8[65536]{0}', space=vmem, size = 0x10000, scoped, tag = 'input window, operand 4, single buffered']
    #allocation9 [shape = 's32[1]{0}', space=sflag, size = 0x4, scoped, tag = 'scoped memory for tpu_custom_call.1']
    #allocation10 [shape = 'u8[65536]{0}', space=vmem, size = 0x10000, scoped, tag = 'input window, operand 6, single buffered']
    #allocation11 [shape = 'u8[4096]{0}', space=vmem, size = 0x1000, scoped, tag = 'output window, operand 0, single buffered']
    %15 = vsyncpa [#allocation3], 0
    %16 = vsyncpa [#allocation6], 0
    %17 = vsyncpa [#allocation9], 0
    %18 = vsyncpa [#allocation4], 0
    // Predicated region
    $region2: #{tpu_custom_call.1} parent=1 // pred_check
      _
    $region3: #{tpu_custom_call.1} parent=1 // pred_check_branch
      %20 = sbr.rel (0) target = $region5
    $region4: #{tpu_custom_call.1} parent=1 // pred_region
      %s22 = ssub.s32 128, 128
      %23 = vsyncadd [#allocation3], %s22
      %s25 = sshll.u32 [#allocation2], 4
      %s26 = int_to_ptr.vmem [resolvable:$true] %s25
      %28 = dma.hbm_to_vmem [thread:$0]  %s0, 128, %s26, [#allocation3]
    $region5: #{tpu_custom_call.1} parent=1 // pred_fallthru
      _
    // Predicated region
    $region6: #{tpu_custom_call.1} parent=1 // pred_check
      _
    $region7: #{tpu_custom_call.1} parent=1 // pred_check_branch
      %30 = sbr.rel (0) target = $region9
    $region8: #{tpu_custom_call.1} parent=1 // pred_region
      %s32 = ssub.s32 128, 128
      %33 = vsyncadd [#allocation6], %s32
      %s35 = sshll.u32 [#allocation5], 4
      %s36 = int_to_ptr.vmem [resolvable:$true] %s35
      %38 = dma.hbm_to_vmem [thread:$0]  %s1, 128, %s36, [#allocation6]
    $region9: #{tpu_custom_call.1} parent=1 // pred_fallthru
      _
    // Predicated region
    $region10: #{tpu_custom_call.1} parent=1 // pred_check
      _
    $region11: #{tpu_custom_call.1} parent=1 // pred_check_branch
      %40 = sbr.rel (0) target = $region13
    $region12: #{tpu_custom_call.1} parent=1 // pred_region
      %s42 = ssub.s32 2048, 2048
      %43 = vsyncadd [#allocation6], %s42
      %s44 = sshll.u32 [#allocation7], 4
      %s45 = int_to_ptr.vmem [resolvable:$true] %s44
      %50 = dma.hbm_to_vmem [thread:$0]  %s2, 2048, %s45, [#allocation6], 128, 128, 8
    $region13: #{tpu_custom_call.1} parent=1 // pred_fallthru
      _
    // Predicated region
    $region14: #{tpu_custom_call.1} parent=1 // pred_check
      _
    $region15: #{tpu_custom_call.1} parent=1 // pred_check_branch
      %52 = sbr.rel (0) target = $region17
    $region16: #{tpu_custom_call.1} parent=1 // pred_region
      _
    $region17: #{tpu_custom_call.1} parent=1 // pred_fallthru
      _
    // Predicated region
    $region18: #{tpu_custom_call.1} parent=1 // pred_check
      _
    $region19: #{tpu_custom_call.1} parent=1 // pred_check_branch
      %54 = sbr.rel (0) target = $region21
    $region20: #{tpu_custom_call.1} parent=1 // pred_region
      %s56 = ssub.s32 2048, 2048
      %57 = vsyncadd [#allocation9], %s56
      %s58 = sshll.u32 [#allocation8], 4
      %s59 = int_to_ptr.vmem [resolvable:$true] %s58
      %64 = dma.hbm_to_vmem [thread:$0]  %s4, 2048, %s59, [#allocation9], 64, 64, 4
    $region21: #{tpu_custom_call.1} parent=1 // pred_fallthru
      _
    // Predicated region
    $region22: #{tpu_custom_call.1} parent=1 // pred_check
      _
    $region23: #{tpu_custom_call.1} parent=1 // pred_check_branch
      %66 = sbr.rel (0) target = $region25
    $region24: #{tpu_custom_call.1} parent=1 // pred_region
      _
    $region25: #{tpu_custom_call.1} parent=1 // pred_fallthru
      _
    // Predicated region
    $region26: #{tpu_custom_call.1} parent=1 // pred_check
      _
    $region27: #{tpu_custom_call.1} parent=1 // pred_check_branch
      %68 = sbr.rel (0) target = $region29
    $region28: #{tpu_custom_call.1} parent=1 // pred_region
      %s70 = ssub.s32 2048, 2048
      %71 = vsyncadd [#allocation9], %s70
      %s72 = sshll.u32 [#allocation10], 4
      %s73 = int_to_ptr.vmem [resolvable:$true] %s72
      %78 = dma.hbm_to_vmem [thread:$0]  %s6, 2048, %s73, [#allocation9], 64, 64, 4
    $region29: #{tpu_custom_call.1} parent=1 // pred_fallthru
      _
    // Predicated region
    $region30: #{tpu_custom_call.1} parent=1 // pred_check
      _
    $region31: #{tpu_custom_call.1} parent=1 // pred_check_branch
      %80 = sbr.rel (0) target = $region33
    $region32: #{tpu_custom_call.1} parent=1 // pred_region
      _
    $region33: #{tpu_custom_call.1} parent=1 // pred_fallthru
      _
    // Predicated region
    $region34: #{tpu_custom_call.1} parent=1 // pred_check
      _
    $region35: #{tpu_custom_call.1} parent=1 // pred_check_branch
      %82 = sbr.rel (0) target = $region37
    $region36: #{tpu_custom_call.1} parent=1 // pred_region
      _
    $region37: #{tpu_custom_call.1} parent=1 // pred_fallthru
      _
    // Predicated region
    $region38: #{tpu_custom_call.1} parent=1 // pred_check
      _
    $region39: #{tpu_custom_call.1} parent=1 // pred_check_branch
      %84 = sbr.rel (0) target = $region41
    $region40: #{tpu_custom_call.1} parent=1 // pred_region
      _
    $region41: #{tpu_custom_call.1} parent=1 // pred_fallthru
      _
    // Predicated region
    $region42: #{tpu_custom_call.1} parent=1 // pred_check
      _
    $region43: #{tpu_custom_call.1} parent=1 // pred_check_branch
      %86 = sbr.rel (0) target = $region45
    $region44: #{tpu_custom_call.1} parent=1 // pred_region
      %87 = dma.done [#allocation3], 128
    $region45: #{tpu_custom_call.1} parent=1 // pred_fallthru
      _
    // Predicated region
    $region46: #{tpu_custom_call.1} parent=1 // pred_check
      _
    $region47: #{tpu_custom_call.1} parent=1 // pred_check_branch
      %89 = sbr.rel (0) target = $region49
    $region48: #{tpu_custom_call.1} parent=1 // pred_region
      %90 = dma.done [#allocation6], 128
    $region49: #{tpu_custom_call.1} parent=1 // pred_fallthru
      _
    // Predicated region
    $region50: #{tpu_custom_call.1} parent=1 // pred_check
      _
    $region51: #{tpu_custom_call.1} parent=1 // pred_check_branch
      %92 = sbr.rel (0) target = $region53
    $region52: #{tpu_custom_call.1} parent=1 // pred_region
      %93 = dma.done [#allocation6], 2048
    $region53: #{tpu_custom_call.1} parent=1 // pred_fallthru
      _
    // Predicated region
    $region54: #{tpu_custom_call.1} parent=1 // pred_check
      _
    $region55: #{tpu_custom_call.1} parent=1 // pred_check_branch
      %95 = sbr.rel (0) target = $region57
    $region56: #{tpu_custom_call.1} parent=1 // pred_region
      %96 = dma.done [#allocation9], 2048
    $region57: #{tpu_custom_call.1} parent=1 // pred_fallthru
      _
    // Predicated region
    $region58: #{tpu_custom_call.1} parent=1 // pred_check
      _
    $region59: #{tpu_custom_call.1} parent=1 // pred_check_branch
      %98 = sbr.rel (0) target = $region61
    $region60: #{tpu_custom_call.1} parent=1 // pred_region
      %99 = dma.done [#allocation9], 2048
    $region61: #{tpu_custom_call.1} parent=1 // pred_fallthru
      _
    %v101 = vld [vmem:[#allocation2] sm:$0xff]
    %v102 = vld [vmem:[#allocation5] sm:$0xff]
    %v103 = vpack.c.bf16 %v102, %v102
    %v104 = vld [vmem:[#allocation7] sm:$0xff]
    %v105 = vld [vmem:[#allocation7 + $0x8] sm:$0xff]
    %v106 = vld [vmem:[#allocation7 + $0x10] sm:$0xff]
    %v107 = vld [vmem:[#allocation7 + $0x18] sm:$0xff]
    %v108 = vld [vmem:[#allocation7 + $0x20] sm:$0xff]
    %v109 = vld [vmem:[#allocation7 + $0x28] sm:$0xff]
    %v110 = vld [vmem:[#allocation7 + $0x30] sm:$0xff]
    %v111 = vld [vmem:[#allocation7 + $0x38] sm:$0xff]
    %v112 = vld [vmem:[#allocation7 + $0x40] sm:$0xff]
    %v113 = vld [vmem:[#allocation7 + $0x48] sm:$0xff]
    %v114 = vld [vmem:[#allocation7 + $0x50] sm:$0xff]
    %v115 = vld [vmem:[#allocation7 + $0x58] sm:$0xff]
    %v116 = vld [vmem:[#allocation7 + $0x60] sm:$0xff]
    %v117 = vld [vmem:[#allocation7 + $0x68] sm:$0xff]
    %v118 = vld [vmem:[#allocation7 + $0x70] sm:$0xff]
    %v119 = vld [vmem:[#allocation7 + $0x78] sm:$0xff]
    %v120 = vld [vmem:[%s3] sm:$0x3]
    %v122 = vlaneseq
    %v123 = vshrl.u32 %v122, 7
    %v124 = vsub.s32 0, %v123
    %v125 = vrot.slane %v120, %v124
    %v126 = vlaneseq
    %v127 = vshrl.u32 %v126, 7
    %v128 = vsub.s32 1, %v127
    %v129 = vrot.slane %v120, %v128
    %v148 = vunpack.c.l.b16 %v104
    %v149 = vunpack.c.h.b16 %v104
    %v150 = vunpack.c.l.b16 %v105
    %v151 = vunpack.c.h.b16 %v105
    %v152 = vunpack.c.l.b16 %v106
    %v153 = vunpack.c.h.b16 %v106
    %v154 = vunpack.c.l.b16 %v107
    %v155 = vunpack.c.h.b16 %v107
    %v156 = vunpack.c.l.b16 %v108
    %v157 = vunpack.c.h.b16 %v108
    %v158 = vunpack.c.l.b16 %v109
    %v159 = vunpack.c.h.b16 %v109
    %v160 = vunpack.c.l.b16 %v110
    %v161 = vunpack.c.h.b16 %v110
    %v162 = vunpack.c.l.b16 %v111
    %v163 = vunpack.c.h.b16 %v111
    %v164 = vunpack.c.l.b16 %v112
    %v165 = vunpack.c.h.b16 %v112
    %v166 = vunpack.c.l.b16 %v113
    %v167 = vunpack.c.h.b16 %v113
    %v168 = vunpack.c.l.b16 %v114
    %v169 = vunpack.c.h.b16 %v114
    %v170 = vunpack.c.l.b16 %v115
    %v171 = vunpack.c.h.b16 %v115
    %v172 = vunpack.c.l.b16 %v116
    %v173 = vunpack.c.h.b16 %v116
    %v174 = vunpack.c.l.b16 %v117
    %v175 = vunpack.c.h.b16 %v117
    %v176 = vunpack.c.l.b16 %v118
    %v177 = vunpack.c.h.b16 %v118
    %v178 = vunpack.c.l.b16 %v119
    %v179 = vunpack.c.h.b16 %v119
    %v180 = vpack.c.b16 %v150, %v148
    %v181 = vpack.c.b16 %v151, %v149
    %v182 = vpack.c.b16 %v154, %v152
    %v183 = vpack.c.b16 %v155, %v153
    %v184 = vpack.c.b16 %v158, %v156
    %v185 = vpack.c.b16 %v159, %v157
    %v186 = vpack.c.b16 %v162, %v160
    %v187 = vpack.c.b16 %v163, %v161
    %v188 = vpack.c.b16 %v166, %v164
    %v189 = vpack.c.b16 %v167, %v165
    %v190 = vpack.c.b16 %v170, %v168
    %v191 = vpack.c.b16 %v171, %v169
    %v192 = vpack.c.b16 %v174, %v172
    %v193 = vpack.c.b16 %v175, %v173
    %v194 = vpack.c.b16 %v178, %v176
    %v195 = vpack.c.b16 %v179, %v177
    %212 = vmatprep.subr.bf16.mxu0 %v195
    %213 = vmatpush1.bf16.msra.mxu0 %v194
    %214 = vmatprep.subr.bf16.mxu0 %v193
    %215 = vmatpush1.bf16.msra.mxu0 %v192
    %216 = vmatprep.subr.bf16.mxu0 %v191
    %217 = vmatpush1.bf16.msra.mxu0 %v190
    %218 = vmatprep.subr.bf16.mxu0 %v189
    %219 = vmatpush1.bf16.msra.mxu0 %v188
    %220 = vmatprep.subr.bf16.mxu0 %v187
    %221 = vmatpush1.bf16.msra.mxu0 %v186
    %222 = vmatprep.subr.bf16.mxu0 %v185
    %223 = vmatpush1.bf16.msra.mxu0 %v184
    %224 = vmatprep.subr.bf16.mxu0 %v183
    %225 = vmatpush1.bf16.msra.mxu0 %v182
    %226 = vmatprep.subr.bf16.mxu0 %v181
    %227 = vmatpush1.bf16.msra.mxu0 %v180
    %228 = vmatprep.subr.bf16.mxu0 0
    %229 = vmatpush2.bf16.msra.mxu0 0
    %230 = vmatprep.subr.bf16.mxu0 0
    %231 = vmatpush2.bf16.msra.mxu0 0
    %232 = vmatprep.subr.bf16.mxu0 0
    %233 = vmatpush2.bf16.msra.mxu0 0
    %234 = vmatprep.subr.bf16.mxu0 0
    %235 = vmatpush2.bf16.msra.mxu0 0
    %236 = vmatprep.subr.bf16.mxu0 0
    %237 = vmatpush2.bf16.msra.mxu0 0
    %238 = vmatprep.subr.bf16.mxu0 0
    %239 = vmatpush2.bf16.msra.mxu0 0
    %240 = vmatprep.subr.bf16.mxu0 0
    %241 = vmatpush2.bf16.msra.mxu0 0
    %242 = vmatprep.subr.bf16.mxu0 0
    %243 = vmatpush2.bf16.msra.mxu0 0
    %244 = vmatprep.mubr.bf16.mxu0 0
    %245 = vmatmul.mubr.bf16.gmra.mxu0 %v103
    %v246 = vpop.f32.mrf.mxu0
    %v247 = vadd.f32 %v125, %v246
    %v248 = vpop.f32.mrf.mxu0
    %v249 = vadd.f32 %v129, %v248
    %v250 = vpop.f32.mrf.mxu0
    %v251 = vpop.f32.mrf.mxu0
    %252 = vdwg.mxu0
    %v253 = vmax.f32 %v247, 0.0
    %v254 = vmax.f32 %v249, 0.0
    %v255 = vpack.c.bf16 %v253, %v253
    %v256 = vpack.c.bf16 %v254, %v254
    %v257 = vld [vmem:[#allocation8] sm:$0xf]
    %v258 = vld [vmem:[#allocation8 + $0x4] sm:$0xf]
    %v259 = vld [vmem:[#allocation8 + $0x8] sm:$0xf]
    %v260 = vld [vmem:[#allocation8 + $0xc] sm:$0xf]
    %v261 = vld [vmem:[#allocation8 + $0x10] sm:$0xf]
    %v262 = vld [vmem:[#allocation8 + $0x14] sm:$0xf]
    %v263 = vld [vmem:[#allocation8 + $0x18] sm:$0xf]
    %v264 = vld [vmem:[#allocation8 + $0x1c] sm:$0xf]
    %v265 = vld [vmem:[#allocation8 + $0x20] sm:$0xf]
    %v266 = vld [vmem:[#allocation8 + $0x24] sm:$0xf]
    %v267 = vld [vmem:[#allocation8 + $0x28] sm:$0xf]
    %v268 = vld [vmem:[#allocation8 + $0x2c] sm:$0xf]
    %v269 = vld [vmem:[#allocation8 + $0x30] sm:$0xf]
    %v270 = vld [vmem:[#allocation8 + $0x34] sm:$0xf]
    %v271 = vld [vmem:[#allocation8 + $0x38] sm:$0xf]
    %v272 = vld [vmem:[#allocation8 + $0x3c] sm:$0xf]
    %v273 = vld [vmem:[#allocation8 + $0x40] sm:$0xf]
    %v274 = vld [vmem:[#allocation8 + $0x44] sm:$0xf]
    %v275 = vld [vmem:[#allocation8 + $0x48] sm:$0xf]
    %v276 = vld [vmem:[#allocation8 + $0x4c] sm:$0xf]
    %v277 = vld [vmem:[#allocation8 + $0x50] sm:$0xf]
    %v278 = vld [vmem:[#allocation8 + $0x54] sm:$0xf]
    %v279 = vld [vmem:[#allocation8 + $0x58] sm:$0xf]
    %v280 = vld [vmem:[#allocation8 + $0x5c] sm:$0xf]
    %v281 = vld [vmem:[#allocation8 + $0x60] sm:$0xf]
    %v282 = vld [vmem:[#allocation8 + $0x64] sm:$0xf]
    %v283 = vld [vmem:[#allocation8 + $0x68] sm:$0xf]
    %v284 = vld [vmem:[#allocation8 + $0x6c] sm:$0xf]
    %v285 = vld [vmem:[#allocation8 + $0x70] sm:$0xf]
    %v286 = vld [vmem:[#allocation8 + $0x74] sm:$0xf]
    %v287 = vld [vmem:[#allocation8 + $0x78] sm:$0xf]
    %v288 = vld [vmem:[#allocation8 + $0x7c] sm:$0xf]
    %v289 = vld [vmem:[%s5] sm:$0x1]
    %v291 = vlaneseq
    %v292 = vshrl.u32 %v291, 7
    %v293 = vsub.s32 0, %v292
    %v294 = vrot.slane %v289, %v293
    %v328 = vunpack.c.l.b16 %v257
    %v329 = vunpack.c.l.b16 %v258
    %v330 = vunpack.c.l.b16 %v259
    %v331 = vunpack.c.l.b16 %v260
    %v332 = vunpack.c.l.b16 %v261
    %v333 = vunpack.c.l.b16 %v262
    %v334 = vunpack.c.l.b16 %v263
    %v335 = vunpack.c.l.b16 %v264
    %v336 = vunpack.c.l.b16 %v265
    %v337 = vunpack.c.l.b16 %v266
    %v338 = vunpack.c.l.b16 %v267
    %v339 = vunpack.c.l.b16 %v268
    %v340 = vunpack.c.l.b16 %v269
    %v341 = vunpack.c.l.b16 %v270
    %v342 = vunpack.c.l.b16 %v271
    %v343 = vunpack.c.l.b16 %v272
    %v344 = vunpack.c.l.b16 %v273
    %v345 = vunpack.c.l.b16 %v274
    %v346 = vunpack.c.l.b16 %v275
    %v347 = vunpack.c.l.b16 %v276
    %v348 = vunpack.c.l.b16 %v277
    %v349 = vunpack.c.l.b16 %v278
    %v350 = vunpack.c.l.b16 %v279
    %v351 = vunpack.c.l.b16 %v280
    %v352 = vunpack.c.l.b16 %v281
    %v353 = vunpack.c.l.b16 %v282
    %v354 = vunpack.c.l.b16 %v283
    %v355 = vunpack.c.l.b16 %v284
    %v356 = vunpack.c.l.b16 %v285
    %v357 = vunpack.c.l.b16 %v286
    %v358 = vunpack.c.l.b16 %v287
    %v359 = vunpack.c.l.b16 %v288
    %v360 = vpack.c.b16 %v329, %v328
    %v361 = vpack.c.b16 %v331, %v330
    %v362 = vpack.c.b16 %v333, %v332
    %v363 = vpack.c.b16 %v335, %v334
    %v364 = vpack.c.b16 %v337, %v336
    %v365 = vpack.c.b16 %v339, %v338
    %v366 = vpack.c.b16 %v341, %v340
    %v367 = vpack.c.b16 %v343, %v342
    %v368 = vpack.c.b16 %v345, %v344
    %v369 = vpack.c.b16 %v347, %v346
    %v370 = vpack.c.b16 %v349, %v348
    %v371 = vpack.c.b16 %v351, %v350
    %v372 = vpack.c.b16 %v353, %v352
    %v373 = vpack.c.b16 %v355, %v354
    %v374 = vpack.c.b16 %v357, %v356
    %v375 = vpack.c.b16 %v359, %v358
    %392 = vmatprep.subr.bf16.mxu0 0
    %393 = vmatpush1.bf16.msra.mxu0 %v367
    %394 = vmatprep.subr.bf16.mxu0 0
    %395 = vmatpush1.bf16.msra.mxu0 %v366
    %396 = vmatprep.subr.bf16.mxu0 0
    %397 = vmatpush1.bf16.msra.mxu0 %v365
    %398 = vmatprep.subr.bf16.mxu0 0
    %399 = vmatpush1.bf16.msra.mxu0 %v364
    %400 = vmatprep.subr.bf16.mxu0 0
    %401 = vmatpush1.bf16.msra.mxu0 %v363
    %402 = vmatprep.subr.bf16.mxu0 0
    %403 = vmatpush1.bf16.msra.mxu0 %v362
    %404 = vmatprep.subr.bf16.mxu0 0
    %405 = vmatpush1.bf16.msra.mxu0 %v361
    %406 = vmatprep.subr.bf16.mxu0 0
    %407 = vmatpush1.bf16.msra.mxu0 %v360
    %408 = vmatprep.subr.bf16.mxu0 0
    %409 = vmatpush2.bf16.msra.mxu0 %v375
    %410 = vmatprep.subr.bf16.mxu0 0
    %411 = vmatpush2.bf16.msra.mxu0 %v374
    %412 = vmatprep.subr.bf16.mxu0 0
    %413 = vmatpush2.bf16.msra.mxu0 %v373
    %414 = vmatprep.subr.bf16.mxu0 0
    %415 = vmatpush2.bf16.msra.mxu0 %v372
    %416 = vmatprep.subr.bf16.mxu0 0
    %417 = vmatpush2.bf16.msra.mxu0 %v371
    %418 = vmatprep.subr.bf16.mxu0 0
    %419 = vmatpush2.bf16.msra.mxu0 %v370
    %420 = vmatprep.subr.bf16.mxu0 0
    %421 = vmatpush2.bf16.msra.mxu0 %v369
    %422 = vmatprep.subr.bf16.mxu0 0
    %423 = vmatpush2.bf16.msra.mxu0 %v368
    %424 = vmatprep.mubr.bf16.mxu0 %v256
    %425 = vmatmul.mubr.bf16.gmra.mxu0 %v255
    %v426 = vpop.f32.mrf.mxu0
    %v427 = vadd.f32 %v294, %v426
    %v428 = vpop.f32.mrf.mxu0
    %v429 = vpop.f32.mrf.mxu0
    %v430 = vpop.f32.mrf.mxu0
    %431 = vdwg.mxu0
    %v432 = vld [vmem:[#allocation10] sm:$0xf]
    %v433 = vld [vmem:[#allocation10 + $0x4] sm:$0xf]
    %v434 = vld [vmem:[#allocation10 + $0x8] sm:$0xf]
    %v435 = vld [vmem:[#allocation10 + $0xc] sm:$0xf]
    %v436 = vld [vmem:[#allocation10 + $0x10] sm:$0xf]
    %v437 = vld [vmem:[#allocation10 + $0x14] sm:$0xf]
    %v438 = vld [vmem:[#allocation10 + $0x18] sm:$0xf]
    %v439 = vld [vmem:[#allocation10 + $0x1c] sm:$0xf]
    %v440 = vld [vmem:[#allocation10 + $0x20] sm:$0xf]
    %v441 = vld [vmem:[#allocation10 + $0x24] sm:$0xf]
    %v442 = vld [vmem:[#allocation10 + $0x28] sm:$0xf]
    %v443 = vld [vmem:[#allocation10 + $0x2c] sm:$0xf]
    %v444 = vld [vmem:[#allocation10 + $0x30] sm:$0xf]
    %v445 = vld [vmem:[#allocation10 + $0x34] sm:$0xf]
    %v446 = vld [vmem:[#allocation10 + $0x38] sm:$0xf]
    %v447 = vld [vmem:[#allocation10 + $0x3c] sm:$0xf]
    %v448 = vld [vmem:[#allocation10 + $0x40] sm:$0xf]
    %v449 = vld [vmem:[#allocation10 + $0x44] sm:$0xf]
    %v450 = vld [vmem:[#allocation10 + $0x48] sm:$0xf]
    %v451 = vld [vmem:[#allocation10 + $0x4c] sm:$0xf]
    %v452 = vld [vmem:[#allocation10 + $0x50] sm:$0xf]
    %v453 = vld [vmem:[#allocation10 + $0x54] sm:$0xf]
    %v454 = vld [vmem:[#allocation10 + $0x58] sm:$0xf]
    %v455 = vld [vmem:[#allocation10 + $0x5c] sm:$0xf]
    %v456 = vld [vmem:[#allocation10 + $0x60] sm:$0xf]
    %v457 = vld [vmem:[#allocation10 + $0x64] sm:$0xf]
    %v458 = vld [vmem:[#allocation10 + $0x68] sm:$0xf]
    %v459 = vld [vmem:[#allocation10 + $0x6c] sm:$0xf]
    %v460 = vld [vmem:[#allocation10 + $0x70] sm:$0xf]
    %v461 = vld [vmem:[#allocation10 + $0x74] sm:$0xf]
    %v462 = vld [vmem:[#allocation10 + $0x78] sm:$0xf]
    %v463 = vld [vmem:[#allocation10 + $0x7c] sm:$0xf]
    %v464 = vld [vmem:[%s7] sm:$0x1]
    %v466 = vlaneseq
    %v467 = vshrl.u32 %v466, 7
    %v468 = vsub.s32 0, %v467
    %v469 = vrot.slane %v464, %v468
    %v503 = vunpack.c.l.b16 %v432
    %v504 = vunpack.c.l.b16 %v433
    %v505 = vunpack.c.l.b16 %v434
    %v506 = vunpack.c.l.b16 %v435
    %v507 = vunpack.c.l.b16 %v436
    %v508 = vunpack.c.l.b16 %v437
    %v509 = vunpack.c.l.b16 %v438
    %v510 = vunpack.c.l.b16 %v439
    %v511 = vunpack.c.l.b16 %v440
    %v512 = vunpack.c.l.b16 %v441
    %v513 = vunpack.c.l.b16 %v442
    %v514 = vunpack.c.l.b16 %v443
    %v515 = vunpack.c.l.b16 %v444
    %v516 = vunpack.c.l.b16 %v445
    %v517 = vunpack.c.l.b16 %v446
    %v518 = vunpack.c.l.b16 %v447
    %v519 = vunpack.c.l.b16 %v448
    %v520 = vunpack.c.l.b16 %v449
    %v521 = vunpack.c.l.b16 %v450
    %v522 = vunpack.c.l.b16 %v451
    %v523 = vunpack.c.l.b16 %v452
    %v524 = vunpack.c.l.b16 %v453
    %v525 = vunpack.c.l.b16 %v454
    %v526 = vunpack.c.l.b16 %v455
    %v527 = vunpack.c.l.b16 %v456
    %v528 = vunpack.c.l.b16 %v457
    %v529 = vunpack.c.l.b16 %v458
    %v530 = vunpack.c.l.b16 %v459
    %v531 = vunpack.c.l.b16 %v460
    %v532 = vunpack.c.l.b16 %v461
    %v533 = vunpack.c.l.b16 %v462
    %v534 = vunpack.c.l.b16 %v463
    %v535 = vpack.c.b16 %v504, %v503
    %v536 = vpack.c.b16 %v506, %v505
    %v537 = vpack.c.b16 %v508, %v507
    %v538 = vpack.c.b16 %v510, %v509
    %v539 = vpack.c.b16 %v512, %v511
    %v540 = vpack.c.b16 %v514, %v513
    %v541 = vpack.c.b16 %v516, %v515
    %v542 = vpack.c.b16 %v518, %v517
    %v543 = vpack.c.b16 %v520, %v519
    %v544 = vpack.c.b16 %v522, %v521
    %v545 = vpack.c.b16 %v524, %v523
    %v546 = vpack.c.b16 %v526, %v525
    %v547 = vpack.c.b16 %v528, %v527
    %v548 = vpack.c.b16 %v530, %v529
    %v549 = vpack.c.b16 %v532, %v531
    %v550 = vpack.c.b16 %v534, %v533
    %567 = vmatprep.subr.bf16.mxu0 0
    %568 = vmatpush1.bf16.msra.mxu0 %v542
    %569 = vmatprep.subr.bf16.mxu0 0
    %570 = vmatpush1.bf16.msra.mxu0 %v541
    %571 = vmatprep.subr.bf16.mxu0 0
    %572 = vmatpush1.bf16.msra.mxu0 %v540
    %573 = vmatprep.subr.bf16.mxu0 0
    %574 = vmatpush1.bf16.msra.mxu0 %v539
    %575 = vmatprep.subr.bf16.mxu0 0
    %576 = vmatpush1.bf16.msra.mxu0 %v538
    %577 = vmatprep.subr.bf16.mxu0 0
    %578 = vmatpush1.bf16.msra.mxu0 %v537
    %579 = vmatprep.subr.bf16.mxu0 0
    %580 = vmatpush1.bf16.msra.mxu0 %v536
    %581 = vmatprep.subr.bf16.mxu0 0
    %582 = vmatpush1.bf16.msra.mxu0 %v535
    %583 = vmatprep.subr.bf16.mxu0 0
    %584 = vmatpush2.bf16.msra.mxu0 %v550
    %585 = vmatprep.subr.bf16.mxu0 0
    %586 = vmatpush2.bf16.msra.mxu0 %v549
    %587 = vmatprep.subr.bf16.mxu0 0
    %588 = vmatpush2.bf16.msra.mxu0 %v548
    %589 = vmatprep.subr.bf16.mxu0 0
    %590 = vmatpush2.bf16.msra.mxu0 %v547
    %591 = vmatprep.subr.bf16.mxu0 0
    %592 = vmatpush2.bf16.msra.mxu0 %v546
    %593 = vmatprep.subr.bf16.mxu0 0
    %594 = vmatpush2.bf16.msra.mxu0 %v545
    %595 = vmatprep.subr.bf16.mxu0 0
    %596 = vmatpush2.bf16.msra.mxu0 %v544
    %597 = vmatprep.subr.bf16.mxu0 0
    %598 = vmatpush2.bf16.msra.mxu0 %v543
    %599 = vmatprep.mubr.bf16.mxu0 %v256
    %600 = vmatmul.mubr.bf16.gmra.mxu0 %v255
    %v601 = vpop.f32.mrf.mxu0
    %v602 = vadd.f32 %v469, %v601
    %v603 = vpop.f32.mrf.mxu0
    %v604 = vpop.f32.mrf.mxu0
    %v605 = vpop.f32.mrf.mxu0
    %606 = vdwg.mxu0
    %607 = vadd.xlane.f32.xlu0 %v101
    %v608 = vpop.xlane.xlu0 %607
    %v609 = vrcp.pop 128.0
    %v610 = vmul.f32 %v608, %v609
    %v611 = vsub.f32 %v101, %v610
    %v612 = vmul.f32 %v611, %v611
    %613 = vadd.xlane.f32.xlu0 %v612
    %v614 = vpop.xlane.xlu0 %613
    %v615 = vmul.f32 %v614, %v609
    %v616 = vadd.f32 %v615, 1e-05
    %v617 = vrsqrt.pop %v616
    %v618 = vmul.f32 %v611, %v617
    %v619 = vld [vmem:[%s8] sm:$0x1]
    %v621 = vlaneseq
    %v622 = vshrl.u32 %v621, 7
    %v623 = vsub.s32 0, %v622
    %v624 = vrot.slane %v619, %v623
    %v626 = vmul.f32 %v618, %v624
    %v627 = vld [vmem:[%s9] sm:$0x1]
    %v629 = vlaneseq
    %v630 = vshrl.u32 %v629, 7
    %v631 = vsub.s32 0, %v630
    %v632 = vrot.slane %v627, %v631
    %v634 = vadd.f32 %v626, %v632
    %v635 = vadd.f32 %v427, 1.0
    %v636 = vmul.f32 %v634, %v635
    %v637 = vadd.f32 %v602, %v102
    %v638 = vadd.f32 %v636, %v637
    %639 = vst [vmem:[#allocation11] sm:$0xff] %v638
    // Predicated region
    $region62: #{tpu_custom_call.1} parent=1 // pred_check
      _
    $region63: #{tpu_custom_call.1} parent=1 // pred_check_branch
      %641 = sbr.rel (0) target = $region65
    $region64: #{tpu_custom_call.1} parent=1 // pred_region
      %s643 = ssub.s32 128, 128
      %644 = vsyncadd [#allocation4], %s643
      %s646 = sshll.u32 [#allocation11], 4
      %s647 = int_to_ptr.vmem [resolvable:$true] %s646
      %649 = dma.vmem_to_hbm [thread:$0]  %s647, 128, %s10, [#allocation4]
    $region65: #{tpu_custom_call.1} parent=1 // pred_fallthru
      _
    // Predicated region
    $region66: #{tpu_custom_call.1} parent=1 // pred_check
      _
    $region67: #{tpu_custom_call.1} parent=1 // pred_check_branch
      %651 = sbr.rel (0) target = $region69
    $region68: #{tpu_custom_call.1} parent=1 // pred_region
      %652 = dma.done [#allocation4], 128
    $region69: #{tpu_custom_call.1} parent=1 // pred_fallthru
      _
    %653 = vsyncpa [#allocation3], 1
    %654 = vsyncpa [#allocation6], 1
    %655 = vsyncpa [#allocation9], 1
    %656 = vsyncpa [#allocation4], 1

</llo_original>
